<compile_context>
chip_gen: v6e
topology: v6e:2x2x1
jax: 0.10.0
libtpu: 0.0.40
codegen_flags: <defaults>
</compile_context>

<pallas_src>
import math
from functools import partial

import jax
import jax.numpy as jnp
from jax import lax
from jax.experimental import pallas as pl
from jax.experimental.pallas import tpu as pltpu


# ----------------------------------------------------------------------------
# small helpers
# ----------------------------------------------------------------------------
def _round_up(x, m):
    return ((x + m - 1) // m) * m


def _largest_divisor(total, cap, quantum):
    """Largest d <= cap with total % d == 0 and (d % quantum == 0 or d == total)."""
    cap = max(min(cap, total), 1)
    for d in range(cap, 0, -1):
        if total % d == 0 and (d % quantum == 0 or d == total):
            return d
    return total


def _pick_time_chunk(T, B_blk, H_pad, budget_bytes=24 << 20):
    # Double-buffered streamed bytes per timestep: gx (4H) in + h_seq (H) out, f32.
    per_step = 2 * (4 + 1) * B_blk * H_pad * 4
    max_tc = max(1, budget_bytes // per_step)
    return _largest_divisor(T, int(max_tc), 1)


# ----------------------------------------------------------------------------
# Kernel 1: hoisted input projection, per gate:
#   gx[g] = x2d @ W_ih[g] + (b_ih + b_hh)[g]      streamed over row tiles.
# ----------------------------------------------------------------------------
def _input_proj_kernel(x_ref, w_ref, b_ref, o_ref):
    o_ref[0] = (
        jnp.dot(x_ref[...], w_ref[0], preferred_element_type=jnp.float32)
        + b_ref[0]
    ).astype(o_ref.dtype)


def input_projection_pallas(x2d, w_ih_p, bias_p):
    R, I_eff = x2d.shape
    _, _, H_pad = w_ih_p.shape
    r_tile = _largest_divisor(R, 512, 8)       # lane/sublane-aligned row tiles
    n_rt = R // r_tile

    f32b = 4
    need = 2 * f32b * (r_tile * I_eff + I_eff * H_pad + H_pad + r_tile * H_pad) + (2 << 20)
    vmem_limit = int(min(max(need, 32 << 20), 48 << 20))

    return pl.pallas_call(
        _input_proj_kernel,
        out_shape=jax.ShapeDtypeStruct((4, R, H_pad), jnp.float32),
        grid_spec=pltpu.PrefetchScalarGridSpec(
            num_scalar_prefetch=0,
            grid=(4, n_rt),   # gate outer -> W_ih gate block stays resident across row tiles
            in_specs=[
                pl.BlockSpec((r_tile, I_eff), lambda g, r: (r, 0)),
                pl.BlockSpec((1, I_eff, H_pad), lambda g, r: (g, 0, 0)),
                pl.BlockSpec((1, 1, H_pad), lambda g, r: (g, 0, 0)),
            ],
            out_specs=pl.BlockSpec((1, r_tile, H_pad), lambda g, r: (g, r, 0)),
        ),
        compiler_params=pltpu.CompilerParams(
            dimension_semantics=("parallel", "parallel"),
            vmem_limit_bytes=vmem_limit),
    )(x2d, w_ih_p, bias_p)


# ----------------------------------------------------------------------------
# Kernel 2: recurrence, time-chunked.  h/c persist in VMEM scratch across chunks.
# ----------------------------------------------------------------------------
def _lstm_recurrent_kernel(gx_ref, whh_ref, h0_ref, c0_ref,
                           hseq_ref, cn_ref, h_sc, c_sc, *, t_chunk):
    # (Re-)load the initial state at the first time chunk of each batch block.
    @pl.when(pl.program_id(1) == 0)
    def _():
        h_sc[...] = h0_ref[...]
        c_sc[...] = c0_ref[...]

    def step(t, carry):
        h = h_sc[...]
        c = c_sc[...]
        # Per-gate (B, H_pad) @ (H_pad, H_pad); W_hh read straight from its VMEM ref.
        i_g = gx_ref[0, t] + jnp.dot(h, whh_ref[0], preferred_element_type=jnp.float32)
        f_g = gx_ref[1, t] + jnp.dot(h, whh_ref[1], preferred_element_type=jnp.float32)
        g_g = gx_ref[2, t] + jnp.dot(h, whh_ref[2], preferred_element_type=jnp.float32)
        o_g = gx_ref[3, t] + jnp.dot(h, whh_ref[3], preferred_element_type=jnp.float32)
        c_new = jax.nn.sigmoid(f_g) * c + jax.nn.sigmoid(i_g) * jnp.tanh(g_g)
        h_new = jax.nn.sigmoid(o_g) * jnp.tanh(c_new)
        h_sc[...] = h_new
        c_sc[...] = c_new
        hseq_ref[t] = h_new.astype(hseq_ref.dtype)
        return carry

    # Unroll=2 so the next step's gx loads / h_seq store address math can co-issue
    # under the current step's MXU + EUP (sigmoid/tanh) chain.
    lax.fori_loop(0, t_chunk, step, 0, unroll=2)

    # Cheap (B,H) VMEM copy per chunk; the last chunk's value is what lands in HBM.
    cn_ref[...] = c_sc[...]


def lstm_recurrence_pallas(gx, w_hh_p, h0_p, c0_p):
    _, T, B_pad, H_pad = gx.shape
    # Split batch across two blocks (second TensorCore on v7x) when it stays
    # (8,128)-tileable; the time recurrence itself is inherently serial.
    n_b = 2 if (B_pad % 16 == 0) else 1
    B_blk = B_pad // n_b

    t_chunk = _pick_time_chunk(T, B_blk, H_pad)
    n_chunks = T // t_chunk

    f32b = 4
    gx_blk = 4 * t_chunk * B_blk * H_pad * f32b
    hs_blk = t_chunk * B_blk * H_pad * f32b
    whh_b = 4 * H_pad * H_pad * f32b
    small = 6 * B_blk * H_pad * f32b
    need = 2 * (gx_blk + hs_blk + whh_b + small) + 2 * B_blk * H_pad * f32b + (2 << 20)
    vmem_limit = int(min(max(need, 32 << 20), 48 << 20))

    kernel = partial(_lstm_recurrent_kernel, t_chunk=t_chunk)
    h_seq, c_n = pl.pallas_call(
        kernel,
        out_shape=(jax.ShapeDtypeStruct((T, B_pad, H_pad), jnp.float32),
                   jax.ShapeDtypeStruct((B_pad, H_pad), jnp.float32)),
        grid_spec=pltpu.PrefetchScalarGridSpec(
            num_scalar_prefetch=0,
            grid=(n_b, n_chunks),
            in_specs=[
                pl.BlockSpec((4, t_chunk, B_blk, H_pad), lambda b, t: (0, t, b, 0)),
                pl.BlockSpec((4, H_pad, H_pad), lambda b, t: (0, 0, 0)),
                pl.BlockSpec((B_blk, H_pad), lambda b, t: (b, 0)),
                pl.BlockSpec((B_blk, H_pad), lambda b, t: (b, 0)),
            ],
            out_specs=[
                pl.BlockSpec((t_chunk, B_blk, H_pad), lambda b, t: (t, b, 0)),
                pl.BlockSpec((B_blk, H_pad), lambda b, t: (b, 0)),
            ],
            scratch_shapes=[
                pltpu.VMEM((B_blk, H_pad), jnp.float32),   # h state
                pltpu.VMEM((B_blk, H_pad), jnp.float32),   # c state
            ],
        ),
        compiler_params=pltpu.CompilerParams(
            dimension_semantics=("parallel", "arbitrary"),
            vmem_limit_bytes=vmem_limit),
    )(gx, w_hh_p, h0_p, c0_p)
    return h_seq, c_n


# ----------------------------------------------------------------------------
# One LSTM layer in the padded, lane-aligned domain.
#   x_p: (T, B_pad, I_eff) already padded.  Returns padded h_seq, c_n.
# ----------------------------------------------------------------------------
def lstm_layer_pallas(x_p, h0_p, c0_p, w_ih, w_hh, b_ih, b_hh, *, hidden_size):
    T, B_pad, I_eff = x_p.shape
    H = hidden_size
    H_pad = h0_p.shape[-1]
    I = w_ih.shape[0]

    # Gate-separated, zero-padded weights (PyTorch gate order i, f, g, o).
    w_ih_g = jnp.transpose(w_ih.reshape(I, 4, H), (1, 0, 2))      # (4, I, H)
    w_hh_g = jnp.transpose(w_hh.reshape(H, 4, H), (1, 0, 2))      # (4, H, H)
    bias_g = (b_ih + b_hh).reshape(4, 1, H)

    w_ih_p = jnp.zeros((4, I_eff, H_pad), jnp.float32).at[:, :I, :H].set(w_ih_g)
    w_hh_p = jnp.zeros((4, H_pad, H_pad), jnp.float32).at[:, :H, :H].set(w_hh_g)
    bias_p = jnp.zeros((4, 1, H_pad), jnp.float32).at[:, :, :H].set(bias_g)

    # Hoisted input projection (streamed, row- and gate-tiled).
    gx = input_projection_pallas(x_p.reshape(T * B_pad, I_eff), w_ih_p, bias_p)
    gx = gx.reshape(4, T, B_pad, H_pad)

    # Recurrence (time-chunked, h/c resident in VMEM scratch).
    return lstm_recurrence_pallas(gx, w_hh_p, h0_p, c0_p)


# ----------------------------------------------------------------------------
# Module wrapper mirroring the PyTorch LSTM forward.
# ----------------------------------------------------------------------------
def init_lstm_params(key, input_size, hidden_size, num_layers):
    stdv = 1.0 / math.sqrt(hidden_size)
    params = []
    in_sz = input_size
    for _ in range(num_layers):
        key, k1, k2, k3, k4 = jax.random.split(key, 5)
        params.append(dict(
            w_ih=jax.random.uniform(k1, (in_sz, 4 * hidden_size), jnp.float32, -stdv, stdv),
            w_hh=jax.random.uniform(k2, (hidden_size, 4 * hidden_size), jnp.float32, -stdv, stdv),
            b_ih=jax.random.uniform(k3, (4 * hidden_size,), jnp.float32, -stdv, stdv),
            b_hh=jax.random.uniform(k4, (4 * hidden_size,), jnp.float32, -stdv, stdv),
        ))
        in_sz = hidden_size
    return params


def lstm_forward(params, x, init_states, batch_first=False):
    """x: (T, B, I) (or (B, T, I) if batch_first). init_states: (h0, c0), each (L, B, H).
       Returns (h_seq of last layer, (h_n, c_n)) like the PyTorch module."""
    if batch_first:
        x = jnp.transpose(x, (1, 0, 2))
    h0_all, c0_all = init_states
    T, B, I = x.shape
    L = len(params)
    H = h0_all.shape[-1]

    B_pad = _round_up(B, 8)
    H_pad = _round_up(H, 128)
    I_pad = _round_up(I, 128)

    # Pad once; all layers run in the padded, lane-dense domain (padded hidden
    # columns provably stay zero through the recurrence).
    x_p = jnp.zeros((T, B_pad, I_pad), jnp.float32).at[:, :B, :I].set(x.astype(jnp.float32))
    h0_p = jnp.zeros((L, B_pad, H_pad), jnp.float32).at[:, :B, :H].set(h0_all.astype(jnp.float32))
    c0_p = jnp.zeros((L, B_pad, H_pad), jnp.float32).at[:, :B, :H].set(c0_all.astype(jnp.float32))

    inputs = x_p
    h_last, c_last = [], []
    h_seq = None
    for i, p in enumerate(params):
        h_seq, c_n = lstm_layer_pallas(inputs, h0_p[i], c0_p[i],
                                       p["w_ih"], p["w_hh"], p["b_ih"], p["b_hh"],
                                       hidden_size=H)
        h_last.append(h_seq[-1])
        c_last.append(c_n)
        inputs = h_seq   # stays padded / lane-aligned between layers

    out = h_seq[:, :B, :H]
    h_n = jnp.stack(h_last, axis=0)[:, :B, :H]
    c_n = jnp.stack(c_last, axis=0)[:, :B, :H]
    if batch_first:
        out = jnp.transpose(out, (1, 0, 2))
    return out, (h_n, c_n)


# ----------------------------------------------------------------------------
# Pure-JAX reference for correctness checking
# ----------------------------------------------------------------------------
def lstm_forward_ref(params, x, init_states):
    h0_all, c0_all = init_states
    inputs = x
    h_last_t, c_last_t = [], []
    h_seq = None
    for i, p in enumerate(params):
        h_t, c_t = h0_all[i], c0_all[i]
        hs, cs = [], []
        for t in range(x.shape[0]):
            gates = inputs[t] @ p["w_ih"] + p["b_ih"] + h_t @ p["w_hh"] + p["b_hh"]
            H = h_t.shape[-1]
            i_g, f_g, g_g, o_g = (gates[:, 0:H], gates[:, H:2 * H],
                                  gates[:, 2 * H:3 * H], gates[:, 3 * H:4 * H])
            c_t = jax.nn.sigmoid(f_g) * c_t + jax.nn.sigmoid(i_g) * jnp.tanh(g_g)
            h_t = jax.nn.sigmoid(o_g) * jnp.tanh(c_t)
            hs.append(h_t); cs.append(c_t)
        h_seq = jnp.stack(hs, axis=0)
        h_last_t.append(h_seq[-1]); c_last_t.append(cs[-1])
        inputs = h_seq
    return h_seq, (jnp.stack(h_last_t, 0), jnp.stack(c_last_t, 0))


if __name__ == "__main__":
    T, B, I, H, L = 8, 2, 16, 32, 2

    key = jax.random.PRNGKey(0)
    kp, kx, kh, kc = jax.random.split(key, 4)
    params = init_lstm_params(kp, I, H, L)
    x = jax.random.normal(kx, (T, B, I), jnp.float32)
    h0 = jax.random.normal(kh, (L, B, H), jnp.float32)
    c0 = jax.random.normal(kc, (L, B, H), jnp.float32)

    out, (h_n, c_n) = lstm_forward(params, x, (h0, c0), batch_first=False)
    out = jax.block_until_ready(out)
    h_n = jax.block_until_ready(h_n)
    c_n = jax.block_until_ready(c_n)

    out_r, (h_r, c_r) = lstm_forward_ref(params, x, (h0, c0))
    assert jnp.allclose(out, out_r, atol=2e-4, rtol=2e-4), "h_seq mismatch"
    assert jnp.allclose(h_n, h_r, atol=2e-4, rtol=2e-4), "h_n mismatch"
    assert jnp.allclose(c_n, c_r, atol=2e-4, rtol=2e-4), "c_n mismatch"

    print("KERNEL_OK")
</pallas_src>

<mosaic_0001>
module attributes {stable_mosaic.version = 11 : i64} {
  func.func @_input_proj_kernel(%arg0: i32, %arg1: i32, %arg2: memref<64x128xf32, #tpu.memory_space<vmem>>, %arg3: memref<1x128x128xf32, #tpu.memory_space<vmem>>, %arg4: memref<1x1x128xf32, #tpu.memory_space<vmem>>, %arg5: memref<1x64x128xf32, #tpu.memory_space<vmem>>) attributes {dimension_semantics = [#tpu.dimension_semantics<parallel>, #tpu.dimension_semantics<parallel>], iteration_bounds = array<i64: 4, 1>, scalar_prefetch = 0 : i64, scratch_operands = 0 : i64, tpu.core_type = #tpu.core_type<tc>, window_params = [{transform_indices = @transform_0, window_bounds = array<i64: 64, 128>}, {transform_indices = @transform_1, window_bounds = array<i64: 1, 128, 128>}, {transform_indices = @transform_2, window_bounds = array<i64: 1, 1, 128>}, {transform_indices = @transform_3, window_bounds = array<i64: 1, 64, 128>}]} {
    %c0 = arith.constant 0 : index
    %c0_0 = arith.constant 0 : index
    %0 = vector.load %arg2[%c0, %c0_0] : memref<64x128xf32, #tpu.memory_space<vmem>>, vector<64x128xf32>
    %c0_1 = arith.constant 0 : index
    %c0_2 = arith.constant 0 : index
    %c0_3 = arith.constant 0 : index
    %1 = vector.load %arg3[%c0_1, %c0_2, %c0_3] : memref<1x128x128xf32, #tpu.memory_space<vmem>>, vector<1x128x128xf32>
    %2 = vector.shape_cast %1 : vector<1x128x128xf32> to vector<128x128xf32>
    %cst = arith.constant dense<0.000000e+00> : vector<64x128xf32>
    %3 = tpu.matmul %0, %2, %cst {dimension_numbers = #tpu.dot_dimension_numbers<[1], [0], [0], [1], [0, 0, 1, 1], [], []>} : vector<64x128xf32>, vector<128x128xf32>, vector<64x128xf32> -> vector<64x128xf32>
    %c0_4 = arith.constant 0 : index
    %c0_5 = arith.constant 0 : index
    %c0_6 = arith.constant 0 : index
    %4 = vector.load %arg4[%c0_4, %c0_5, %c0_6] : memref<1x1x128xf32, #tpu.memory_space<vmem>>, vector<1x1x128xf32>
    %5 = vector.shape_cast %4 : vector<1x1x128xf32> to vector<1x128xf32>
    %6 = vector.broadcast %5 : vector<1x128xf32> to vector<64x128xf32>
    %7 = arith.addf %3, %6 : vector<64x128xf32>
    %c0_7 = arith.constant 0 : index
    %c0_8 = arith.constant 0 : index
    %c0_9 = arith.constant 0 : index
    %8 = vector.load %arg5[%c0_7, %c0_8, %c0_9] : memref<1x64x128xf32, #tpu.memory_space<vmem>>, vector<1x64x128xf32>
    %9 = vector.shape_cast %8 : vector<1x64x128xf32> to vector<64x128xf32>
    %10 = vector.shape_cast %7 : vector<64x128xf32> to vector<1x64x128xf32>
    tpu.vector_store %arg5[%c0_7, %c0_8, %c0_9], %10 {strides = array<i32>} : memref<1x64x128xf32, #tpu.memory_space<vmem>>, vector<1x64x128xf32>,
    return
  }
  func.func @transform_0(%arg0: i32, %arg1: i32) -> (i32, i32) {
    %c0_i32 = arith.constant 0 : i32
    %c0_i32_0 = arith.constant 0 : i32
    return %arg1, %c0_i32 : i32, i32
  }
  func.func @transform_1(%arg0: i32, %arg1: i32) -> (i32, i32, i32) {
    %c0_i32 = arith.constant 0 : i32
    %c0_i32_0 = arith.constant 0 : i32
    %c0_i32_1 = arith.constant 0 : i32
    return %arg0, %c0_i32, %c0_i32_0 : i32, i32, i32
  }
  func.func @transform_2(%arg0: i32, %arg1: i32) -> (i32, i32, i32) {
    %c0_i32 = arith.constant 0 : i32
    %c0_i32_0 = arith.constant 0 : i32
    %c0_i32_1 = arith.constant 0 : i32
    return %arg0, %c0_i32, %c0_i32_0 : i32, i32, i32
  }
  func.func @transform_3(%arg0: i32, %arg1: i32) -> (i32, i32, i32) {
    %c0_i32 = arith.constant 0 : i32
    %c0_i32_0 = arith.constant 0 : i32
    return %arg0, %arg1, %c0_i32 : i32, i32, i32
  }
}

</mosaic_0001>

<llo_original>
// kernel: tpu_custom_call.1
$region0: #{tpu_custom_call.1}
  #allocation0 [shape = 'u32[]', space=smem, size = 0x4, offset = 0x4, fixed_abs, tag = 'smem constant byte address 0x4 - core index']
  #allocation1 [shape = 'u32[144,128]{1,0:T(1,128)}', space=vmem, size = 0x12000, scoped, tag = 'internal scratch']
  %s0 = inlined_call_operand.hbm [shape: f32[64,128], index: 0, kind: input, shape index: {}]
  %s1 = inlined_call_operand.hbm [shape: f32[4,128,128], index: 1, kind: input, shape index: {}]
  %s2 = inlined_call_operand.hbm [shape: f32[4,1,128], index: 2, kind: input, shape index: {}]
  %s3 = inlined_call_operand.hbm [shape: f32[4,64,128], index: 3, kind: output, shape index: {}]
  %s4 = sld [smem:[#allocation0]]
  $region57: #{tpu_custom_call.1} parent=0
    _
  %s6 = ssub.s32 1, %s4
  %s7 = scalar_select 0, %s6, %s4
  $region1: #{tpu_custom_call.1} parent=0
    #allocation2 [shape = 'u8[32768]{0}', space=vmem, size = 0x8000, scoped, tag = 'input window, operand 0, single buffered']
    #allocation3 [shape = 's32[2]{0}', space=sflag, size = 0x8, scoped, tag = 'scoped memory for tpu_custom_call.1']
    #allocation4 [shape = 's32[2]{0}', space=sflag, size = 0x8, scoped, tag = 'scoped memory for tpu_custom_call.1']
    #allocation5 [shape = 'u8[131072]{0}', space=vmem, size = 0x20000, scoped, tag = 'input window, operand 1']
    #allocation6 [shape = 's32[2]{0}', space=sflag, size = 0x8, scoped, tag = 'scoped memory for tpu_custom_call.1']
    #allocation7 [shape = 'u8[1024]{0}', space=vmem, size = 0x400, scoped, tag = 'input window, operand 2']
    #allocation8 [shape = 'u8[65536]{0}', space=vmem, size = 0x10000, scoped, tag = 'output window, operand 0']
    %8 = vsyncpa [#allocation3], 0
    %9 = vsyncpa [#allocation6], 0
    %s10 = scalar_lea.sflag [#allocation6], 1
    %11 = vsyncpa %s10, 0
    %12 = vsyncpa [#allocation4], 0
    %s13 = scalar_lea.sflag [#allocation4], 1
    %14 = vsyncpa %s13, 0
    loop: start=0, step=1, limit=6
    $region2: #{tpu_custom_call.1} parent=1 // loop_pre_header
      _
    $region3: #{tpu_custom_call.1} parent=1 // loop_header
      %s16 = sphi 0, %s20
      %p17 = scmp.ge.s32.totalorder %s16, 6
      %s23 = sphi 0, %s35
      %s24 = sphi 0, %s31
      %s25 = sphi 0, %s23
      %s26 = sphi 0, %s24
      %s27 = sphi 0, %s25
      %s28 = sphi 0, %s26
      %s38 = sphi 0, %s40
      %s41 = sphi 0, %s38
      %s42 = sphi 0, %s41
      %s58 = sphi 0, %s42
      %s64 = sphi 0, %s66
      %s67 = sphi 0, %s64
      %s68 = sphi 0, %s67
      %s84 = sphi 0, %s68
      %s90 = sphi 0, %s92
      %s93 = sphi 0, %s90
      %s94 = sphi 0, %s93
      %s110 = sphi 0, %s94
      %s118 = sphi 0, %s120
      %s121 = sphi 0, %s118
      %s122 = sphi 0, %s121
      %s138 = sphi 0, %s122
    $region4: #{tpu_custom_call.1} parent=1 // loop_header_branch
      %19 = sbr.rel (%p17) target = $region8
    $region5: #{tpu_custom_call.1} parent=1 // loop_body
      %s21 = ssub.s32 %s16, 1
      %s22 = ssub.s32 %s16, 2
      %s29 = sadd.s32 1, %s24
      %p30 = scmp.ge.s32.totalorder %s29, 1
      %s31 = scalar_select %p30, 0, %s29
      %s32 = sadd.s32 1, %s23
      %s33 = scalar_select %p30, %s32, %s23
      %p34 = scmp.ge.s32.totalorder %s33, 4
      %s35 = scalar_select %p34, 0, %s33
      %s36 = ssub.s32 %s24, %s31
      %p37 = scmp.eq.s32.totalorder %s36, 0
      %s39 = sadd.s32 %s38, 1
      %s40 = scalar_select %p37, %s38, %s39
      %p43 = pneg %p37
      %p44 = scmp.eq.s32.totalorder %s16, 3
      %p45 = por %p43, %p44
      %p46 = scmp.ne.s32.totalorder %s38, %s41
      %p47 = scmp.eq.s32.totalorder %s16, 0
      %p48 = por %p46, %p47
      %p49 = scmp.ne.s32.totalorder %s38, %s41
      %p50 = scmp.eq.s32.totalorder %s21, 3
      %p51 = por %p49, %p50
      %p52 = scmp.ne.s32.totalorder %s41, %s42
      %p53 = scmp.eq.s32.totalorder %s21, 0
      %p54 = por %p52, %p53
      %p55 = scmp.ne.s32.totalorder %s41, %s42
      %p56 = scmp.eq.s32.totalorder %s22, 3
      %p57 = por %p55, %p56
      %p59 = scmp.ne.s32.totalorder %s42, %s58
      %p60 = scmp.eq.s32.totalorder %s22, 0
      %p61 = por %p59, %p60
      %s62 = ssub.s32 %s23, %s35
      %p63 = scmp.eq.s32.totalorder %s62, 0
      %s65 = sadd.s32 %s64, 1
      %s66 = scalar_select %p63, %s64, %s65
      %p69 = pneg %p63
      %p70 = scmp.eq.s32.totalorder %s16, 3
      %p71 = por %p69, %p70
      %p72 = scmp.ne.s32.totalorder %s64, %s67
      %p73 = scmp.eq.s32.totalorder %s16, 0
      %p74 = por %p72, %p73
      %p75 = scmp.ne.s32.totalorder %s64, %s67
      %p76 = scmp.eq.s32.totalorder %s21, 3
      %p77 = por %p75, %p76
      %p78 = scmp.ne.s32.totalorder %s67, %s68
      %p79 = scmp.eq.s32.totalorder %s21, 0
      %p80 = por %p78, %p79
      %p81 = scmp.ne.s32.totalorder %s67, %s68
      %p82 = scmp.eq.s32.totalorder %s22, 3
      %p83 = por %p81, %p82
      %p85 = scmp.ne.s32.totalorder %s68, %s84
      %p86 = scmp.eq.s32.totalorder %s22, 0
      %p87 = por %p85, %p86
      %s88 = ssub.s32 %s23, %s35
      %p89 = scmp.eq.s32.totalorder %s88, 0
      %s91 = sadd.s32 %s90, 1
      %s92 = scalar_select %p89, %s90, %s91
      %p95 = pneg %p89
      %p96 = scmp.eq.s32.totalorder %s16, 3
      %p97 = por %p95, %p96
      %p98 = scmp.ne.s32.totalorder %s90, %s93
      %p99 = scmp.eq.s32.totalorder %s16, 0
      %p100 = por %p98, %p99
      %p101 = scmp.ne.s32.totalorder %s90, %s93
      %p102 = scmp.eq.s32.totalorder %s21, 3
      %p103 = por %p101, %p102
      %p104 = scmp.ne.s32.totalorder %s93, %s94
      %p105 = scmp.eq.s32.totalorder %s21, 0
      %p106 = por %p104, %p105
      %p107 = scmp.ne.s32.totalorder %s93, %s94
      %p108 = scmp.eq.s32.totalorder %s22, 3
      %p109 = por %p107, %p108
      %p111 = scmp.ne.s32.totalorder %s94, %s110
      %p112 = scmp.eq.s32.totalorder %s22, 0
      %p113 = por %p111, %p112
      %s114 = ssub.s32 %s23, %s35
      %s115 = ssub.s32 %s24, %s31
      %s116 = sor.u32 %s114, %s115
      %p117 = scmp.eq.s32.totalorder %s116, 0
      %s119 = sadd.s32 %s118, 1
      %s120 = scalar_select %p117, %s118, %s119
      %p123 = pneg %p117
      %p124 = scmp.eq.s32.totalorder %s16, 3
      %p125 = por %p123, %p124
      %p126 = scmp.ne.s32.totalorder %s118, %s121
      %p127 = scmp.eq.s32.totalorder %s16, 0
      %p128 = por %p126, %p127
      %p129 = scmp.ne.s32.totalorder %s118, %s121
      %p130 = scmp.eq.s32.totalorder %s21, 3
      %p131 = por %p129, %p130
      %p132 = scmp.ne.s32.totalorder %s121, %s122
      %p133 = scmp.eq.s32.totalorder %s21, 0
      %p134 = por %p132, %p133
      %p135 = scmp.ne.s32.totalorder %s121, %s122
      %p136 = scmp.eq.s32.totalorder %s22, 3
      %p137 = por %p135, %p136
      %p139 = scmp.ne.s32.totalorder %s122, %s138
      %p140 = scmp.eq.s32.totalorder %s22, 0
      %p141 = por %p139, %p140
      %p142 = scmp.le.s32.totalorder 1, %s16
      %p143 = scmp.lt.s32.totalorder %s16, 5
      %p144 = pnand %p142, %p143
      %p145 = pneg %p144
      // Predicated region
      $region9: #{tpu_custom_call.1} parent=5 // pred_check
        _
      $region10: #{tpu_custom_call.1} parent=5 // pred_check_branch
        %147 = sbr.rel (%p144) target = $region12
      $region11: #{tpu_custom_call.1} parent=5 // pred_region
        %s148 = ssub.s32 %s16, 1
        // Predicated region
        $region13: #{tpu_custom_call.1} parent=11 // pred_check
          %p149 = pneg %p54
        $region14: #{tpu_custom_call.1} parent=11 // pred_check_branch
          %151 = sbr.rel (%p149) target = $region16
        $region15: #{tpu_custom_call.1} parent=11 // pred_region
          %s152 = smul.u32 8, %s26
          %s154 = ssub.s32 1024, 1024
          %155 = vsyncadd [#allocation3], %s154
          %s156 = smul.addr %s152, 128
          %s157 = scalar_lea.hbm %s0, %s156
          %s158 = sshll.u32 [#allocation2], 4
          %s159 = int_to_ptr.vmem [resolvable:$true] %s158
          %164 = dma.hbm_to_vmem [thread:$0]  %s157, 1024, %s159, [#allocation3], 128, 128, 8
        $region16: #{tpu_custom_call.1} parent=11 // pred_fallthru
          _
      $region12: #{tpu_custom_call.1} parent=5 // pred_fallthru
        _
      %p165 = scmp.lt.s32.totalorder %s16, 4
      // Predicated region
      $region17: #{tpu_custom_call.1} parent=5 // pred_check
        %p166 = pneg %p165
      $region18: #{tpu_custom_call.1} parent=5 // pred_check_branch
        %168 = sbr.rel (%p166) target = $region20
      $region19: #{tpu_custom_call.1} parent=5 // pred_region
        // Predicated region
        $region21: #{tpu_custom_call.1} parent=19 // pred_check
          %p169 = pneg %p74
        $region22: #{tpu_custom_call.1} parent=19 // pred_check_branch
          %171 = sbr.rel (%p169) target = $region24
        $region23: #{tpu_custom_call.1} parent=19 // pred_region
          %s172 = sand.u32 %s16, 1
          %s173 = scalar_lea.sflag [#allocation6], %s172
          %s174 = sand.u32 %s64, 1
          %s175 = smul.addr %s174, 128
          %s176 = scalar_lea.vmem [#allocation5], %s175
          %s178 = ssub.s32 2048, 2048
          %179 = vsyncadd %s173, %s178
          %s180 = smul.addr %s23, 16
          %s181 = smul.addr %s180, 128
          %s182 = scalar_lea.hbm %s1, %s181
          %s183 = sshll.u32 %s176, 4
          %s184 = int_to_ptr.vmem [resolvable:$true] %s183
          %189 = dma.hbm_to_vmem [thread:$0]  %s182, 2048, %s184, %s173, 128, 128, 8
        $region24: #{tpu_custom_call.1} parent=19 // pred_fallthru
          _
        // Predicated region
        $region25: #{tpu_custom_call.1} parent=19 // pred_check
          %p190 = pneg %p100
        $region26: #{tpu_custom_call.1} parent=19 // pred_check_branch
          %192 = sbr.rel (%p190) target = $region28
        $region27: #{tpu_custom_call.1} parent=19 // pred_region
          %s193 = sand.u32 %s16, 1
          %s194 = scalar_lea.sflag [#allocation6], %s193
          %s195 = sand.u32 %s90, 1
          %s196 = scalar_lea.vmem [#allocation7], %s195
          %s198 = ssub.s32 16, 16
          %199 = vsyncadd %s194, %s198
          %s200 = smul.addr %s23, 16
          %s201 = scalar_lea.hbm %s2, %s200
          %s203 = sshll.u32 %s196, 4
          %s204 = int_to_ptr.vmem [resolvable:$true] %s203
          %206 = dma.hbm_to_vmem [thread:$0]  %s201, 16, %s204, %s194
        $region28: #{tpu_custom_call.1} parent=19 // pred_fallthru
          _
      $region20: #{tpu_custom_call.1} parent=5 // pred_fallthru
        _
      %p207 = scmp.le.s32.totalorder 1, %s16
      %p208 = scmp.lt.s32.totalorder %s16, 5
      %p209 = pnand %p207, %p208
      %p210 = pneg %p209
      // Predicated region
      $region29: #{tpu_custom_call.1} parent=5 // pred_check
        _
      $region30: #{tpu_custom_call.1} parent=5 // pred_check_branch
        %212 = sbr.rel (%p209) target = $region32
      $region31: #{tpu_custom_call.1} parent=5 // pred_region
        %s213 = ssub.s32 %s16, 1
        // Predicated region
        $region33: #{tpu_custom_call.1} parent=31 // pred_check
          %p214 = pneg %p54
        $region34: #{tpu_custom_call.1} parent=31 // pred_check_branch
          %216 = sbr.rel (%p214) target = $region36
        $region35: #{tpu_custom_call.1} parent=31 // pred_region
          %217 = dma.done [#allocation3], 1024
        $region36: #{tpu_custom_call.1} parent=31 // pred_fallthru
          _
        %s218 = sand.u32 %s21, 1
        %s219 = scalar_lea.sflag [#allocation6], %s218
        %s220 = sand.u32 %s67, 1
        %s221 = smul.addr %s220, 128
        %s222 = scalar_lea.vmem [#allocation5], %s221
        // Predicated region
        $region37: #{tpu_custom_call.1} parent=31 // pred_check
          %p223 = pneg %p80
        $region38: #{tpu_custom_call.1} parent=31 // pred_check_branch
          %225 = sbr.rel (%p223) target = $region40
        $region39: #{tpu_custom_call.1} parent=31 // pred_region
          %226 = dma.done %s219, 2048
        $region40: #{tpu_custom_call.1} parent=31 // pred_fallthru
          _
        %s227 = sand.u32 %s21, 1
        %s228 = scalar_lea.sflag [#allocation6], %s227
        %s229 = sand.u32 %s93, 1
        %s230 = scalar_lea.vmem [#allocation7], %s229
        // Predicated region
        $region41: #{tpu_custom_call.1} parent=31 // pred_check
          %p231 = pneg %p106
        $region42: #{tpu_custom_call.1} parent=31 // pred_check_branch
          %233 = sbr.rel (%p231) target = $region44
        $region43: #{tpu_custom_call.1} parent=31 // pred_region
          %234 = dma.done %s228, 16
        $region44: #{tpu_custom_call.1} parent=31 // pred_fallthru
          _
        %p235 = pneg %p54
        %p236 = pneg %p51
        %s237 = sand.u32 %s21, 1
        %s238 = scalar_lea.sflag [#allocation6], %s237
        %s239 = sand.u32 %s67, 1
        %s240 = smul.addr %s239, 128
        %s241 = scalar_lea.vmem [#allocation5], %s240
        %p242 = pneg %p80
        %p243 = pneg %p77
        %s244 = sand.u32 %s21, 1
        %s245 = scalar_lea.sflag [#allocation6], %s244
        %s246 = sand.u32 %s93, 1
        %s247 = scalar_lea.vmem [#allocation7], %s246
        %p248 = pneg %p106
        %p249 = pneg %p103
        %p250 = pneg %p134
        %p251 = pneg %p131
        %s252 = sand.u32 %s121, 1
        %s253 = scalar_lea.sflag [#allocation4], %s252
        %s254 = sand.u32 %s121, 1
        %s255 = smul.addr %s254, 64
        %s256 = scalar_lea.vmem [#allocation8], %s255
        %s257 = smul.u32 8, %s26
        %s258 = smul.u32 8, %s26
        %v259 = vld [vmem:[#allocation2] sm:$0xff]
        %v260 = vld [vmem:[#allocation2 + $0x8] sm:$0xff]
        %v261 = vld [vmem:[#allocation2 + $0x10] sm:$0xff]
        %v262 = vld [vmem:[#allocation2 + $0x18] sm:$0xff]
        %v263 = vld [vmem:[#allocation2 + $0x20] sm:$0xff]
        %v264 = vld [vmem:[#allocation2 + $0x28] sm:$0xff]
        %v265 = vld [vmem:[#allocation2 + $0x30] sm:$0xff]
        %v266 = vld [vmem:[#allocation2 + $0x38] sm:$0xff]
        %v267 = vld [vmem:[%s222] sm:$0xff]
        %v268 = vld [vmem:[%s222 + $0x8] sm:$0xff]
        %v269 = vld [vmem:[%s222 + $0x10] sm:$0xff]
        %v270 = vld [vmem:[%s222 + $0x18] sm:$0xff]
        %v271 = vld [vmem:[%s222 + $0x20] sm:$0xff]
        %v272 = vld [vmem:[%s222 + $0x28] sm:$0xff]
        %v273 = vld [vmem:[%s222 + $0x30] sm:$0xff]
        %v274 = vld [vmem:[%s222 + $0x38] sm:$0xff]
        %v275 = vld [vmem:[%s222 + $0x40] sm:$0xff]
        %v276 = vld [vmem:[%s222 + $0x48] sm:$0xff]
        %v277 = vld [vmem:[%s222 + $0x50] sm:$0xff]
        %v278 = vld [vmem:[%s222 + $0x58] sm:$0xff]
        %v279 = vld [vmem:[%s222 + $0x60] sm:$0xff]
        %v280 = vld [vmem:[%s222 + $0x68] sm:$0xff]
        %v281 = vld [vmem:[%s222 + $0x70] sm:$0xff]
        %v282 = vld [vmem:[%s222 + $0x78] sm:$0xff]
        %v283 = vld [vmem:[%s230] sm:$0x1]
        %v285 = vlaneseq
        %v286 = vshrl.u32 %v285, 7
        %v287 = vsub.s32 0, %v286
        %v288 = vrot.slane %v283, %v287
        %290 = vmatprep.subr.mxu0 0.0
        %291 = vmatpush1.msra.mxu0 %v282
        %292 = vmatprep.subr.mxu0 0.0
        %293 = vmatpush1.msra.mxu0 %v281
        %294 = vmatprep.subr.mxu0 0.0
        %295 = vmatpush1.msra.mxu0 %v280
        %296 = vmatprep.subr.mxu0 0.0
        %297 = vmatpush1.msra.mxu0 %v279
        %298 = vmatprep.subr.mxu0 0.0
        %299 = vmatpush1.msra.mxu0 %v278
        %300 = vmatprep.subr.mxu0 0.0
        %301 = vmatpush1.msra.mxu0 %v277
        %302 = vmatprep.subr.mxu0 0.0
        %303 = vmatpush1.msra.mxu0 %v276
        %304 = vmatprep.subr.mxu0 0.0
        %305 = vmatpush1.msra.mxu0 %v275
        %306 = vmatprep.subr.mxu0 0.0
        %307 = vmatpush1.msra.mxu0 %v274
        %308 = vmatprep.subr.mxu0 0.0
        %309 = vmatpush1.msra.mxu0 %v273
        %310 = vmatprep.subr.mxu0 0.0
        %311 = vmatpush1.msra.mxu0 %v272
        %312 = vmatprep.subr.mxu0 0.0
        %313 = vmatpush1.msra.mxu0 %v271
        %314 = vmatprep.subr.mxu0 0.0
        %315 = vmatpush1.msra.mxu0 %v270
        %316 = vmatprep.subr.mxu0 0.0
        %317 = vmatpush1.msra.mxu0 %v269
        %318 = vmatprep.subr.mxu0 0.0
        %319 = vmatpush1.msra.mxu0 %v268
        %320 = vmatprep.subr.mxu0 0.0
        %321 = vmatpush1.msra.mxu0 %v267
        %322 = vmatprep.subr.mxu0 0.0
        %323 = vmatpush2.msra.mxu0 0.0
        %324 = vmatprep.subr.mxu0 0.0
        %325 = vmatpush2.msra.mxu0 0.0
        %326 = vmatprep.subr.mxu0 0.0
        %327 = vmatpush2.msra.mxu0 0.0
        %328 = vmatprep.subr.mxu0 0.0
        %329 = vmatpush2.msra.mxu0 0.0
        %330 = vmatprep.subr.mxu0 0.0
        %331 = vmatpush2.msra.mxu0 0.0
        %332 = vmatprep.subr.mxu0 0.0
        %333 = vmatpush2.msra.mxu0 0.0
        %334 = vmatprep.subr.mxu0 0.0
        %335 = vmatpush2.msra.mxu0 0.0
        %336 = vmatprep.subr.mxu0 0.0
        %337 = vmatpush2.msra.mxu0 0.0
        %338 = vmatprep.subr.mxu0 0.0
        %339 = vmatpush2.msra.mxu0 0.0
        %340 = vmatprep.subr.mxu0 0.0
        %341 = vmatpush2.msra.mxu0 0.0
        %342 = vmatprep.subr.mxu0 0.0
        %343 = vmatpush2.msra.mxu0 0.0
        %344 = vmatprep.subr.mxu0 0.0
        %345 = vmatpush2.msra.mxu0 0.0
        %346 = vmatprep.subr.mxu0 0.0
        %347 = vmatpush2.msra.mxu0 0.0
        %348 = vmatprep.subr.mxu0 0.0
        %349 = vmatpush2.msra.mxu0 0.0
        %350 = vmatprep.subr.mxu0 0.0
        %351 = vmatpush2.msra.mxu0 0.0
        %352 = vmatprep.subr.mxu0 0.0
        %353 = vmatpush2.msra.mxu0 0.0
        %354 = vmatprep.mubr.f32.mxu0 0.0
        %355 = vmatmul.mubr.f32.gmra.mxu0 %v259
        %v356 = vpop.f32.mrf.mxu0
        %v357 = vadd.f32 %v288, %v356
        %v358 = vpop.f32.mrf.mxu0
        %359 = vmatprep.mubr.f32.mxu0 0.0
        %360 = vmatmul.mubr.f32.gmra.mxu0 %v260
        %v361 = vpop.f32.mrf.mxu0
        %v362 = vadd.f32 %v288, %v361
        %v363 = vpop.f32.mrf.mxu0
        %364 = vmatprep.mubr.f32.mxu0 0.0
        %365 = vmatmul.mubr.f32.gmra.mxu0 %v261
        %v366 = vpop.f32.mrf.mxu0
        %v367 = vadd.f32 %v288, %v366
        %v368 = vpop.f32.mrf.mxu0
        %369 = vmatprep.mubr.f32.mxu0 0.0
        %370 = vmatmul.mubr.f32.gmra.mxu0 %v262
        %v371 = vpop.f32.mrf.mxu0
        %v372 = vadd.f32 %v288, %v371
        %v373 = vpop.f32.mrf.mxu0
        %374 = vmatprep.mubr.f32.mxu0 0.0
        %375 = vmatmul.mubr.f32.gmra.mxu0 %v263
        %v376 = vpop.f32.mrf.mxu0
        %v377 = vadd.f32 %v288, %v376
        %v378 = vpop.f32.mrf.mxu0
        %379 = vmatprep.mubr.f32.mxu0 0.0
        %380 = vmatmul.mubr.f32.gmra.mxu0 %v264
        %v381 = vpop.f32.mrf.mxu0
        %v382 = vadd.f32 %v288, %v381
        %v383 = vpop.f32.mrf.mxu0
        %384 = vmatprep.mubr.f32.mxu0 0.0
        %385 = vmatmul.mubr.f32.gmra.mxu0 %v265
        %v386 = vpop.f32.mrf.mxu0
        %v387 = vadd.f32 %v288, %v386
        %v388 = vpop.f32.mrf.mxu0
        %389 = vmatprep.mubr.f32.mxu0 0.0
        %390 = vmatmul.mubr.f32.gmra.mxu0 %v266
        %v391 = vpop.f32.mrf.mxu0
        %v392 = vadd.f32 %v288, %v391
        %v393 = vpop.f32.mrf.mxu0
        %394 = vdwg.mxu0
        %395 = vst [vmem:[%s256] sm:$0xff] %v357
        %396 = vst [vmem:[%s256 + $0x8] sm:$0xff] %v362
        %397 = vst [vmem:[%s256 + $0x10] sm:$0xff] %v367
        %398 = vst [vmem:[%s256 + $0x18] sm:$0xff] %v372
        %399 = vst [vmem:[%s256 + $0x20] sm:$0xff] %v377
        %400 = vst [vmem:[%s256 + $0x28] sm:$0xff] %v382
        %401 = vst [vmem:[%s256 + $0x30] sm:$0xff] %v387
        %402 = vst [vmem:[%s256 + $0x38] sm:$0xff] %v392
        %s403 = sand.u32 %s121, 1
        %s404 = scalar_lea.sflag [#allocation4], %s403
        %s405 = sand.u32 %s121, 1
        %s406 = smul.addr %s405, 64
        %s407 = scalar_lea.vmem [#allocation8], %s406
        // Predicated region
        $region45: #{tpu_custom_call.1} parent=31 // pred_check
          %p408 = pneg %p131
        $region46: #{tpu_custom_call.1} parent=31 // pred_check_branch
          %410 = sbr.rel (%p408) target = $region48
        $region47: #{tpu_custom_call.1} parent=31 // pred_region
          %s411 = smul.u32 8, %s26
          %s413 = ssub.s32 1024, 1024
          %414 = vsyncadd %s404, %s413
          %s415 = smul.addr %s25, 8
          %s416 = sadd.s32 %s411, %s415
          %s417 = smul.addr %s416, 128
          %s418 = scalar_lea.hbm %s3, %s417
          %s419 = sshll.u32 %s407, 4
          %s420 = int_to_ptr.vmem [resolvable:$true] %s419
          %425 = dma.vmem_to_hbm [thread:$0]  %s420, 1024, %s418, %s404, 128, 128, 8
        $region48: #{tpu_custom_call.1} parent=31 // pred_fallthru
          _
      $region32: #{tpu_custom_call.1} parent=5 // pred_fallthru
        _
      %p426 = scmp.le.s32.totalorder 2, %s16
      // Predicated region
      $region49: #{tpu_custom_call.1} parent=5 // pred_check
        %p427 = pneg %p426
      $region50: #{tpu_custom_call.1} parent=5 // pred_check_branch
        %429 = sbr.rel (%p427) target = $region52
      $region51: #{tpu_custom_call.1} parent=5 // pred_region
        %s430 = ssub.s32 %s16, 2
        // Predicated region
        $region53: #{tpu_custom_call.1} parent=51 // pred_check
          %p431 = pneg %p137
        $region54: #{tpu_custom_call.1} parent=51 // pred_check_branch
          %433 = sbr.rel (%p431) target = $region56
        $region55: #{tpu_custom_call.1} parent=51 // pred_region
          %s434 = sand.u32 %s122, 1
          %s435 = scalar_lea.sflag [#allocation4], %s434
          %s436 = sand.u32 %s122, 1
          %s437 = smul.addr %s436, 64
          %s438 = scalar_lea.vmem [#allocation8], %s437
          %439 = dma.done %s435, 1024
        $region56: #{tpu_custom_call.1} parent=51 // pred_fallthru
          _
      $region52: #{tpu_custom_call.1} parent=5 // pred_fallthru
        _
    $region6: #{tpu_custom_call.1} parent=1 // loop_footer
      %s20 = sadd.s32 1, %s16
    $region7: #{tpu_custom_call.1} parent=1 // loop_footer_branch
      %15 = sbr.rel target = $region3
    $region8: #{tpu_custom_call.1} parent=1 // loop_exit
      _
    %440 = vsyncpa [#allocation3], 1
    %s441 = scalar_lea.sflag [#allocation3], 1
    %442 = vsyncpa %s441, 1
    %443 = vsyncpa [#allocation6], 1
    %s444 = scalar_lea.sflag [#allocation6], 1
    %445 = vsyncpa %s444, 1
    %446 = vsyncpa [#allocation4], 1
    %s447 = scalar_lea.sflag [#allocation4], 1
    %448 = vsyncpa %s447, 1

</llo_original>
